<compile_context>
chip_gen: v7x
topology: tpu7x:2x2x1
jax: 0.10.0
libtpu: 0.0.40
codegen_flags: <defaults>
</compile_context>

<pallas_src>
import functools

import jax
import jax.numpy as jnp
from jax.experimental import pallas as pl
from jax.experimental.pallas import tpu as pltpu


def _unpool_kernel(x_ref, w_ref, ct_ref, o_ref, *, cb, h, w, ows, acc_dtype, batched):
    # x_ref:  (cb, H, W)        input planes (native dtype)
    # w_ref:  (cb, 1, s*s*W)    pre-expanded per-channel weight rows (acc dtype)
    # ct_ref: (W, s*s*W)        combined one-hot scatter matrix (x dtype)
    # o_ref:  (cb, H, s*s*W)    row h, lane ki*Ws + w*s + kj = out[h*s+ki, w*s+kj]
    ct = ct_ref[...]
    if batched:
        # Batch all cb channels into the MXU M dim; one matmul + one multiply + one
        # lane-dense full-block store.  (Reshapes are tile-aligned: H % sublane == 0.)
        x2 = x_ref[...].reshape(cb * h, w)                       # (cb*H, W)
        y = jnp.dot(x2, ct, preferred_element_type=acc_dtype)    # (cb*H, s*s*W)
        o_ref[...] = (y.reshape(cb, h, ows) * w_ref[...]).astype(o_ref.dtype)
    else:
        # H not sublane-aligned: avoid tile-crossing reshapes, go per channel
        # (cb is capped small in the wrapper for this path).
        for i in range(cb):
            y = jnp.dot(x_ref[i], ct, preferred_element_type=acc_dtype)  # (H, s*s*W)
            o_ref[i] = (y * w_ref[i]).astype(o_ref.dtype)


def _round_up(a, b):
    return (a + b - 1) // b * b


def unpool(x, weights, stride, block_channels=None):
    """Pallas TPU implementation of Unpool.forward:
    F.conv_transpose2d(x, weights, stride=stride, groups=C)."""
    N, C, H, W = x.shape
    s = stride
    assert weights.shape == (C, 1, s, s)
    assert jnp.issubdtype(x.dtype, jnp.floating), "unpool: floating dtypes only"

    WS = W * s                 # output width
    OWS = s * WS               # lanes per (channel, input-row): s*s*W
    M = N * C                  # flattened batch*channel axis

    itemsize = jnp.dtype(x.dtype).itemsize
    # Accumulate/apply weights in bf16 when x is bf16 (one-hot matmul is exact; halves
    # the intermediate and doubles VPU throughput on v6e/v7x); otherwise f32.
    acc_dtype = x.dtype if x.dtype == jnp.bfloat16 else jnp.float32
    acc_itemsize = jnp.dtype(acc_dtype).itemsize
    sub = max(8, 32 // itemsize)            # sublane tile: 8 (f32), 16 (bf16)
    sub_acc = max(8, 32 // acc_itemsize)

    batched = (H % sub) == 0

    # ---- VMEM budgeting: pick cb (channels per block) so the double-buffered in/out
    # blocks plus the matmul intermediate fill a large (but v7x-safe) footprint. ----
    hpad = _round_up(H, sub)
    in_pr = hpad * _round_up(W, 128) * itemsize
    out_pr = hpad * _round_up(OWS, 128) * itemsize
    y_pr = hpad * _round_up(OWS, 128) * acc_itemsize          # matmul intermediate
    w_pr = sub_acc * _round_up(OWS, 128) * acc_itemsize       # (1, OWS) padded tile
    ct_b = _round_up(W, sub) * _round_up(OWS, 128) * itemsize

    per_row = 2 * (in_pr + out_pr + w_pr) + y_pr              # double-buffered + temp
    budget = 22 << 20                                         # safe on v5e/v6e/v7x
    if block_channels is None:
        avail = max(budget - 2 * ct_b, per_row)
        cb = int(max(1, min(M, avail // per_row)))
    else:
        cb = int(block_channels)
    if not batched:
        cb = min(cb, 8)                     # bound the unrolled per-channel fallback
    if M >= 2:
        cb = min(cb, -(-M // 2))            # >=2 grid blocks -> even megacore split

    vmem_limit = int(min(max(cb * per_row + 2 * ct_b + (10 << 20), 32 << 20), 48 << 20))

    # ---- constant combined one-hot scatter matrix: ct[w, ki*Ws + w*s + kj] = 1 ----
    lane = jnp.arange(OWS)
    src_col = (lane % WS) // s                                 # source w for each lane
    ct = (jnp.arange(W)[:, None] == src_col[None, :]).astype(x.dtype)   # (W, OWS)

    # ---- pre-expanded per-channel weight rows: wrow[c, ki*Ws + w*s + kj] = w[c,0,ki,kj]
    wrow_c = jnp.broadcast_to(weights[:, 0, :, None, :], (C, s, W, s)).reshape(C, OWS)
    wrow = jnp.broadcast_to(wrow_c[None], (N, C, OWS)).reshape(M, 1, OWS).astype(acc_dtype)

    kernel = functools.partial(_unpool_kernel, cb=cb, h=H, w=W, ows=OWS,
                               acc_dtype=acc_dtype, batched=batched)

    cost = pl.CostEstimate(
        flops=2 * M * H * W * OWS,
        transcendentals=0,
        bytes_accessed=(M * H * W + M * H * OWS) * itemsize
                       + M * OWS * acc_itemsize + W * OWS * itemsize,
    )

    out_flat = pl.pallas_call(
        kernel,
        # (M, H, s*s*W) is bit-identical (row-major) to (N, C, Hs, Ws).
        out_shape=jax.ShapeDtypeStruct((M, H, OWS), x.dtype),
        grid_spec=pltpu.PrefetchScalarGridSpec(
            num_scalar_prefetch=0,
            grid=(pl.cdiv(M, cb),),
            in_specs=[
                pl.BlockSpec((cb, H, W), lambda g: (g, 0, 0)),      # x
                pl.BlockSpec((cb, 1, OWS), lambda g: (g, 0, 0)),    # weight rows
                pl.BlockSpec((W, OWS), lambda g: (0, 0)),           # constant scatter
            ],
            out_specs=pl.BlockSpec((cb, H, OWS), lambda g: (g, 0, 0)),
        ),
        compiler_params=pltpu.CompilerParams(
            dimension_semantics=("parallel",),
            vmem_limit_bytes=vmem_limit),
        cost_estimate=cost,
    )(x.reshape(M, H, W), wrow, ct)

    return out_flat.reshape(N, C, H * s, W * s)


if __name__ == "__main__":
    key = jax.random.PRNGKey(0)
    N, C, H, W = 2, 4, 16, 16
    stride = 2

    x = jax.random.normal(key, (N, C, H, W), dtype=jnp.float32)

    # Deterministic weights exactly as in Unpool.__init__:
    # zeros(C, 1, s, s) with weights[:, :, 0, 0] = 1
    weights = jnp.zeros((C, 1, stride, stride), jnp.float32)
    weights = weights.at[:, :, 0, 0].set(1.0)

    out = unpool(x, weights, stride)
    out = jax.block_until_ready(out)

    # Pure-JAX reference for the grouped transposed conv (non-overlapping case).
    ref = jnp.einsum("nchw,cij->nchiwj", x, weights[:, 0]).reshape(
        N, C, H * stride, W * stride)

    assert out.shape == (N, C, H * stride, W * stride)
    assert out.dtype == x.dtype
    assert jnp.allclose(out, ref, atol=1e-5, rtol=1e-5)
    print("KERNEL_OK")
</pallas_src>

<mosaic_0001>
module attributes {stable_mosaic.version = 11 : i64} {
  func.func @_unpool_kernel(%arg0: i32, %arg1: memref<4x16x16xf32, #tpu.memory_space<vmem>>, %arg2: memref<4x1x64xf32, #tpu.memory_space<vmem>>, %arg3: memref<16x64xf32, #tpu.memory_space<vmem>>, %arg4: memref<4x16x64xf32, #tpu.memory_space<vmem>>) attributes {dimension_semantics = [#tpu.dimension_semantics<parallel>], iteration_bounds = array<i64: 2>, scalar_prefetch = 0 : i64, scratch_operands = 0 : i64, tpu.core_type = #tpu.core_type<tc>, window_params = [{transform_indices = @transform_0, window_bounds = array<i64: 4, 16, 16>}, {transform_indices = @transform_1, window_bounds = array<i64: 4, 1, 64>}, {pipeline_mode = #tpu.pipeline_mode<synchronous>, transform_indices = @transform_2, window_bounds = array<i64: 16, 64>}, {transform_indices = @transform_3, window_bounds = array<i64: 4, 16, 64>}]} {
    %c0 = arith.constant 0 : index
    %c0_0 = arith.constant 0 : index
    %0 = vector.load %arg3[%c0, %c0_0] : memref<16x64xf32, #tpu.memory_space<vmem>>, vector<16x64xf32>
    %c0_1 = arith.constant 0 : index
    %c0_2 = arith.constant 0 : index
    %c0_3 = arith.constant 0 : index
    %1 = vector.load %arg1[%c0_1, %c0_2, %c0_3] : memref<4x16x16xf32, #tpu.memory_space<vmem>>, vector<4x16x16xf32>
    %2 = vector.shape_cast %1 : vector<4x16x16xf32> to vector<64x16xf32>
    %cst = arith.constant dense<0.000000e+00> : vector<64x64xf32>
    %3 = tpu.matmul %2, %0, %cst {dimension_numbers = #tpu.dot_dimension_numbers<[1], [0], [0], [1], [0, 0, 1, 1], [], []>} : vector<64x16xf32>, vector<16x64xf32>, vector<64x64xf32> -> vector<64x64xf32>
    %4 = vector.shape_cast %3 : vector<64x64xf32> to vector<4x16x64xf32>
    %c0_4 = arith.constant 0 : index
    %c0_5 = arith.constant 0 : index
    %c0_6 = arith.constant 0 : index
    %5 = vector.load %arg2[%c0_4, %c0_5, %c0_6] : memref<4x1x64xf32, #tpu.memory_space<vmem>>, vector<4x1x64xf32>
    %6 = vector.broadcast %5 : vector<4x1x64xf32> to vector<4x16x64xf32>
    %7 = arith.mulf %4, %6 : vector<4x16x64xf32>
    %c0_7 = arith.constant 0 : index
    %c0_8 = arith.constant 0 : index
    %c0_9 = arith.constant 0 : index
    %8 = vector.load %arg4[%c0_7, %c0_8, %c0_9] : memref<4x16x64xf32, #tpu.memory_space<vmem>>, vector<4x16x64xf32>
    tpu.vector_store %arg4[%c0_7, %c0_8, %c0_9], %7 {strides = array<i32>} : memref<4x16x64xf32, #tpu.memory_space<vmem>>, vector<4x16x64xf32>,
    return
  }
  func.func @transform_0(%arg0: i32) -> (i32, i32, i32) {
    %c0_i32 = arith.constant 0 : i32
    %c0_i32_0 = arith.constant 0 : i32
    %c0_i32_1 = arith.constant 0 : i32
    return %arg0, %c0_i32, %c0_i32_0 : i32, i32, i32
  }
  func.func @transform_1(%arg0: i32) -> (i32, i32, i32) {
    %c0_i32 = arith.constant 0 : i32
    %c0_i32_0 = arith.constant 0 : i32
    %c0_i32_1 = arith.constant 0 : i32
    return %arg0, %c0_i32, %c0_i32_0 : i32, i32, i32
  }
  func.func @transform_2(%arg0: i32) -> (i32, i32) {
    %c0_i32 = arith.constant 0 : i32
    %c0_i32_0 = arith.constant 0 : i32
    %c0_i32_1 = arith.constant 0 : i32
    return %c0_i32, %c0_i32_0 : i32, i32
  }
  func.func @transform_3(%arg0: i32) -> (i32, i32, i32) {
    %c0_i32 = arith.constant 0 : i32
    %c0_i32_0 = arith.constant 0 : i32
    %c0_i32_1 = arith.constant 0 : i32
    return %arg0, %c0_i32, %c0_i32_0 : i32, i32, i32
  }
}

</mosaic_0001>

<llo_original>
// kernel: tpu_custom_call.1
$region0: #{tpu_custom_call.1}
  #allocation0 [shape = 'u32[]', space=smem, size = 0x4, offset = 0x4, fixed_abs, tag = 'smem constant byte address 0x4 - core index']
  #allocation1 [shape = 'u32[144,128]{1,0:T(1,128)}', space=vmem, size = 0x12000, scoped, tag = 'internal scratch']
  %s0 = inlined_call_operand.hbm [shape: f32[8,16,16], index: 0, kind: input, shape index: {}]
  %s1 = inlined_call_operand.hbm [shape: f32[8,1,64], index: 1, kind: input, shape index: {}]
  %s2 = inlined_call_operand.hbm [shape: f32[16,64], index: 2, kind: input, shape index: {}]
  %s3 = inlined_call_operand.hbm [shape: f32[8,16,64], index: 3, kind: output, shape index: {}]
  %s4 = sld [smem:[#allocation0]]
  $region57: #{tpu_custom_call.1} parent=0
    _
  %s6 = ssub.s32 1, %s4
  %s7 = scalar_select 0, %s6, %s4
  $region1: #{tpu_custom_call.1} parent=0
    #allocation2 [shape = 'u8[65536]{0}', space=vmem, size = 0x10000, scoped, tag = 'input window, operand 0']
    #allocation3 [shape = 's32[2]{0}', space=sflag, size = 0x8, scoped, tag = 'scoped memory for tpu_custom_call.1']
    #allocation4 [shape = 's32[2]{0}', space=sflag, size = 0x8, scoped, tag = 'scoped memory for tpu_custom_call.1']
    #allocation5 [shape = 'u8[4096]{0}', space=vmem, size = 0x1000, scoped, tag = 'input window, operand 1']
    #allocation6 [shape = 's32[2]{0}', space=sflag, size = 0x8, scoped, tag = 'scoped memory for tpu_custom_call.1']
    #allocation7 [shape = 'u8[8192]{0}', space=vmem, size = 0x2000, scoped, tag = 'input window, operand 2, single buffered']
    #allocation8 [shape = 'u8[65536]{0}', space=vmem, size = 0x10000, scoped, tag = 'output window, operand 0']
    %8 = vsyncpa [#allocation3], 0
    %s9 = scalar_lea.sflag [#allocation3], 1
    %10 = vsyncpa %s9, 0
    %11 = vsyncpa [#allocation6], 0
    %s12 = scalar_lea.sflag [#allocation6], 1
    %13 = vsyncpa %s12, 0
    %14 = vsyncpa [#allocation4], 0
    %s15 = scalar_lea.sflag [#allocation4], 1
    %16 = vsyncpa %s15, 0
    loop: start=0, step=1, limit=4
    $region2: #{tpu_custom_call.1} parent=1 // loop_pre_header
      _
    $region3: #{tpu_custom_call.1} parent=1 // loop_header
      %s18 = sphi 0, %s22
      %p19 = scmp.ge.s32.totalorder %s18, 4
      %s28 = sphi 0, %s30
      %s31 = sphi 0, %s28
      %s32 = sphi 0, %s31
      %s48 = sphi 0, %s32
      %s54 = sphi 0, %s56
      %s57 = sphi 0, %s54
      %s58 = sphi 0, %s57
      %s74 = sphi 0, %s58
      %s78 = sphi 0, %s78
      %s80 = sphi 0, %s78
      %s81 = sphi 0, %s80
      %s95 = sphi 0, %s81
      %s101 = sphi 0, %s103
      %s104 = sphi 0, %s101
      %s105 = sphi 0, %s104
      %s121 = sphi 0, %s105
    $region4: #{tpu_custom_call.1} parent=1 // loop_header_branch
      %21 = sbr.rel (%p19) target = $region8
    $region5: #{tpu_custom_call.1} parent=1 // loop_body
      %s23 = ssub.s32 %s18, 1
      %s24 = ssub.s32 %s18, 2
      %s25 = sadd.s32 %s18, 1
      %s26 = ssub.s32 %s18, %s25
      %p27 = scmp.eq.s32.totalorder %s26, 0
      %s29 = sadd.s32 %s28, 1
      %s30 = scalar_select %p27, %s28, %s29
      %p33 = pneg %p27
      %p34 = scmp.eq.s32.totalorder %s18, 1
      %p35 = por %p33, %p34
      %p36 = scmp.ne.s32.totalorder %s28, %s31
      %p37 = scmp.eq.s32.totalorder %s18, 0
      %p38 = por %p36, %p37
      %p39 = scmp.ne.s32.totalorder %s28, %s31
      %p40 = scmp.eq.s32.totalorder %s23, 1
      %p41 = por %p39, %p40
      %p42 = scmp.ne.s32.totalorder %s31, %s32
      %p43 = scmp.eq.s32.totalorder %s23, 0
      %p44 = por %p42, %p43
      %p45 = scmp.ne.s32.totalorder %s31, %s32
      %p46 = scmp.eq.s32.totalorder %s24, 1
      %p47 = por %p45, %p46
      %p49 = scmp.ne.s32.totalorder %s32, %s48
      %p50 = scmp.eq.s32.totalorder %s24, 0
      %p51 = por %p49, %p50
      %s52 = ssub.s32 %s18, %s25
      %p53 = scmp.eq.s32.totalorder %s52, 0
      %s55 = sadd.s32 %s54, 1
      %s56 = scalar_select %p53, %s54, %s55
      %p59 = pneg %p53
      %p60 = scmp.eq.s32.totalorder %s18, 1
      %p61 = por %p59, %p60
      %p62 = scmp.ne.s32.totalorder %s54, %s57
      %p63 = scmp.eq.s32.totalorder %s18, 0
      %p64 = por %p62, %p63
      %p65 = scmp.ne.s32.totalorder %s54, %s57
      %p66 = scmp.eq.s32.totalorder %s23, 1
      %p67 = por %p65, %p66
      %p68 = scmp.ne.s32.totalorder %s57, %s58
      %p69 = scmp.eq.s32.totalorder %s23, 0
      %p70 = por %p68, %p69
      %p71 = scmp.ne.s32.totalorder %s57, %s58
      %p72 = scmp.eq.s32.totalorder %s24, 1
      %p73 = por %p71, %p72
      %p75 = scmp.ne.s32.totalorder %s58, %s74
      %p76 = scmp.eq.s32.totalorder %s24, 0
      %p77 = por %p75, %p76
      %s79 = sadd.s32 %s78, 1
      %p82 = scmp.eq.s32.totalorder %s18, 1
      %p83 = scmp.ne.s32.totalorder %s78, %s80
      %p84 = scmp.eq.s32.totalorder %s18, 0
      %p85 = por %p83, %p84
      %p86 = scmp.ne.s32.totalorder %s78, %s80
      %p87 = scmp.eq.s32.totalorder %s23, 1
      %p88 = por %p86, %p87
      %p89 = scmp.ne.s32.totalorder %s80, %s81
      %p90 = scmp.eq.s32.totalorder %s23, 0
      %p91 = por %p89, %p90
      %p92 = scmp.ne.s32.totalorder %s80, %s81
      %p93 = scmp.eq.s32.totalorder %s24, 1
      %p94 = por %p92, %p93
      %p96 = scmp.ne.s32.totalorder %s81, %s95
      %p97 = scmp.eq.s32.totalorder %s24, 0
      %p98 = por %p96, %p97
      %s99 = ssub.s32 %s18, %s25
      %p100 = scmp.eq.s32.totalorder %s99, 0
      %s102 = sadd.s32 %s101, 1
      %s103 = scalar_select %p100, %s101, %s102
      %p106 = pneg %p100
      %p107 = scmp.eq.s32.totalorder %s18, 1
      %p108 = por %p106, %p107
      %p109 = scmp.ne.s32.totalorder %s101, %s104
      %p110 = scmp.eq.s32.totalorder %s18, 0
      %p111 = por %p109, %p110
      %p112 = scmp.ne.s32.totalorder %s101, %s104
      %p113 = scmp.eq.s32.totalorder %s23, 1
      %p114 = por %p112, %p113
      %p115 = scmp.ne.s32.totalorder %s104, %s105
      %p116 = scmp.eq.s32.totalorder %s23, 0
      %p117 = por %p115, %p116
      %p118 = scmp.ne.s32.totalorder %s104, %s105
      %p119 = scmp.eq.s32.totalorder %s24, 1
      %p120 = por %p118, %p119
      %p122 = scmp.ne.s32.totalorder %s105, %s121
      %p123 = scmp.eq.s32.totalorder %s24, 0
      %p124 = por %p122, %p123
      %p125 = scmp.le.s32.totalorder 1, %s18
      %p126 = scmp.lt.s32.totalorder %s18, 3
      %p127 = pnand %p125, %p126
      %p128 = pneg %p127
      // Predicated region
      $region9: #{tpu_custom_call.1} parent=5 // pred_check
        _
      $region10: #{tpu_custom_call.1} parent=5 // pred_check_branch
        %130 = sbr.rel (%p127) target = $region12
      $region11: #{tpu_custom_call.1} parent=5 // pred_region
        %s131 = ssub.s32 %s18, 1
        // Predicated region
        $region13: #{tpu_custom_call.1} parent=11 // pred_check
          %p132 = pneg %p91
        $region14: #{tpu_custom_call.1} parent=11 // pred_check_branch
          %134 = sbr.rel (%p132) target = $region16
        $region15: #{tpu_custom_call.1} parent=11 // pred_region
          %s136 = ssub.s32 256, 256
          %137 = vsyncadd [#allocation6], %s136
          %s138 = sshll.u32 [#allocation7], 4
          %s139 = int_to_ptr.vmem [resolvable:$true] %s138
          %144 = dma.hbm_to_vmem [thread:$0]  %s2, 256, %s139, [#allocation6], 128, 128, 8
        $region16: #{tpu_custom_call.1} parent=11 // pred_fallthru
          _
      $region12: #{tpu_custom_call.1} parent=5 // pred_fallthru
        _
      %p145 = scmp.lt.s32.totalorder %s18, 2
      // Predicated region
      $region17: #{tpu_custom_call.1} parent=5 // pred_check
        %p146 = pneg %p145
      $region18: #{tpu_custom_call.1} parent=5 // pred_check_branch
        %148 = sbr.rel (%p146) target = $region20
      $region19: #{tpu_custom_call.1} parent=5 // pred_region
        // Predicated region
        $region21: #{tpu_custom_call.1} parent=19 // pred_check
          %p149 = pneg %p38
        $region22: #{tpu_custom_call.1} parent=19 // pred_check_branch
          %151 = sbr.rel (%p149) target = $region24
        $region23: #{tpu_custom_call.1} parent=19 // pred_region
          %s152 = sand.u32 %s28, 1
          %s153 = scalar_lea.sflag [#allocation3], %s152
          %s154 = sand.u32 %s28, 1
          %s155 = smul.addr %s154, 64
          %s156 = scalar_lea.vmem [#allocation2], %s155
          %s157 = smul.u32 4, %s18
          %s159 = ssub.s32 1024, 1024
          %160 = vsyncadd %s153, %s159
          %s161 = smul.addr %s157, 2
          %s162 = smul.addr %s161, 128
          %s163 = scalar_lea.hbm %s0, %s162
          %s164 = sshll.u32 %s156, 4
          %s165 = int_to_ptr.vmem [resolvable:$true] %s164
          %170 = dma.hbm_to_vmem [thread:$0]  %s163, 1024, %s165, %s153, 128, 128, 8
        $region24: #{tpu_custom_call.1} parent=19 // pred_fallthru
          _
        // Predicated region
        $region25: #{tpu_custom_call.1} parent=19 // pred_check
          %p171 = pneg %p64
        $region26: #{tpu_custom_call.1} parent=19 // pred_check_branch
          %173 = sbr.rel (%p171) target = $region28
        $region27: #{tpu_custom_call.1} parent=19 // pred_region
          %s174 = sand.u32 %s18, 1
          %s175 = scalar_lea.sflag [#allocation6], %s174
          %s176 = sand.u32 %s54, 1
          %s177 = smul.addr %s176, 4
          %s178 = scalar_lea.vmem [#allocation5], %s177
          %s179 = smul.u32 4, %s18
          %s181 = ssub.s32 64, 64
          %182 = vsyncadd %s175, %s181
          %s183 = smul.addr %s179, 16
          %s184 = scalar_lea.hbm %s1, %s183
          %s185 = sshll.u32 %s178, 4
          %s186 = int_to_ptr.vmem [resolvable:$true] %s185
          %191 = dma.hbm_to_vmem [thread:$0]  %s184, 64, %s186, %s175, 16, 16, 1
        $region28: #{tpu_custom_call.1} parent=19 // pred_fallthru
          _
      $region20: #{tpu_custom_call.1} parent=5 // pred_fallthru
        _
      %p192 = scmp.le.s32.totalorder 1, %s18
      %p193 = scmp.lt.s32.totalorder %s18, 3
      %p194 = pnand %p192, %p193
      %p195 = pneg %p194
      // Predicated region
      $region29: #{tpu_custom_call.1} parent=5 // pred_check
        _
      $region30: #{tpu_custom_call.1} parent=5 // pred_check_branch
        %197 = sbr.rel (%p194) target = $region32
      $region31: #{tpu_custom_call.1} parent=5 // pred_region
        %s198 = ssub.s32 %s18, 1
        %s199 = sand.u32 %s31, 1
        %s200 = scalar_lea.sflag [#allocation3], %s199
        %s201 = sand.u32 %s31, 1
        %s202 = smul.addr %s201, 64
        %s203 = scalar_lea.vmem [#allocation2], %s202
        // Predicated region
        $region33: #{tpu_custom_call.1} parent=31 // pred_check
          %p204 = pneg %p44
        $region34: #{tpu_custom_call.1} parent=31 // pred_check_branch
          %206 = sbr.rel (%p204) target = $region36
        $region35: #{tpu_custom_call.1} parent=31 // pred_region
          %207 = dma.done %s200, 1024
        $region36: #{tpu_custom_call.1} parent=31 // pred_fallthru
          _
        %s208 = sand.u32 %s23, 1
        %s209 = scalar_lea.sflag [#allocation6], %s208
        %s210 = sand.u32 %s57, 1
        %s211 = smul.addr %s210, 4
        %s212 = scalar_lea.vmem [#allocation5], %s211
        // Predicated region
        $region37: #{tpu_custom_call.1} parent=31 // pred_check
          %p213 = pneg %p70
        $region38: #{tpu_custom_call.1} parent=31 // pred_check_branch
          %215 = sbr.rel (%p213) target = $region40
        $region39: #{tpu_custom_call.1} parent=31 // pred_region
          %216 = dma.done %s209, 64
        $region40: #{tpu_custom_call.1} parent=31 // pred_fallthru
          _
        // Predicated region
        $region41: #{tpu_custom_call.1} parent=31 // pred_check
          %p217 = pneg %p91
        $region42: #{tpu_custom_call.1} parent=31 // pred_check_branch
          %219 = sbr.rel (%p217) target = $region44
        $region43: #{tpu_custom_call.1} parent=31 // pred_region
          %220 = dma.done [#allocation6], 256
        $region44: #{tpu_custom_call.1} parent=31 // pred_fallthru
          _
        %s221 = sand.u32 %s31, 1
        %s222 = scalar_lea.sflag [#allocation3], %s221
        %s223 = sand.u32 %s31, 1
        %s224 = smul.addr %s223, 64
        %s225 = scalar_lea.vmem [#allocation2], %s224
        %p226 = pneg %p44
        %p227 = pneg %p41
        %s228 = sand.u32 %s23, 1
        %s229 = scalar_lea.sflag [#allocation6], %s228
        %s230 = sand.u32 %s57, 1
        %s231 = smul.addr %s230, 4
        %s232 = scalar_lea.vmem [#allocation5], %s231
        %p233 = pneg %p70
        %p234 = pneg %p67
        %p235 = pneg %p91
        %p236 = pneg %p88
        %p237 = pneg %p117
        %p238 = pneg %p114
        %s239 = sand.u32 %s104, 1
        %s240 = scalar_lea.sflag [#allocation4], %s239
        %s241 = sand.u32 %s104, 1
        %s242 = smul.addr %s241, 64
        %s243 = scalar_lea.vmem [#allocation8], %s242
        %s244 = smul.u32 4, %s23
        %s245 = smul.u32 4, %s23
        %s246 = smul.u32 4, %s23
        %v247 = vld [vmem:[#allocation7] sm:$0xff]
        %v248 = vld [vmem:[#allocation7 + $0x8] sm:$0xff]
        %v249 = vld [vmem:[%s203] sm:$0xff]
        %v250 = vld [vmem:[%s203 + $0x8] sm:$0xff]
        %v251 = vld [vmem:[%s203 + $0x10] sm:$0xff]
        %v252 = vld [vmem:[%s203 + $0x18] sm:$0xff]
        %v253 = vld [vmem:[%s203 + $0x20] sm:$0xff]
        %v254 = vld [vmem:[%s203 + $0x28] sm:$0xff]
        %v255 = vld [vmem:[%s203 + $0x30] sm:$0xff]
        %v256 = vld [vmem:[%s203 + $0x38] sm:$0xff]
        %vm257 = vcmask 130048
        %v259 = vsel %vm257, %v249, 0
        %v262 = vsel %vm257, %v250, 0
        %v265 = vsel %vm257, %v251, 0
        %v268 = vsel %vm257, %v252, 0
        %v271 = vsel %vm257, %v253, 0
        %v274 = vsel %vm257, %v254, 0
        %v277 = vsel %vm257, %v255, 0
        %v280 = vsel %vm257, %v256, 0
        %282 = vmatprep.subr.mxu0 0.0
        %283 = vmatpush1.msra.mxu0 %v247
        %284 = vmatprep.subr.mxu0 0.0
        %285 = vmatpush1.msra.mxu0 %v248
        %286 = vmatprep.subr.mxu0 0.0
        %287 = vmatpush1.msra.mxu0 0.0
        %288 = vmatprep.subr.mxu0 0.0
        %289 = vmatpush1.msra.mxu0 0.0
        %290 = vmatprep.subr.mxu0 0.0
        %291 = vmatpush1.msra.mxu0 0.0
        %292 = vmatprep.subr.mxu0 0.0
        %293 = vmatpush1.msra.mxu0 0.0
        %294 = vmatprep.subr.mxu0 0.0
        %295 = vmatpush1.msra.mxu0 0.0
        %296 = vmatprep.subr.mxu0 0.0
        %297 = vmatpush1.msra.mxu0 0.0
        %298 = vmatprep.subr.mxu0 0.0
        %299 = vmatpush1.msra.mxu0 0.0
        %300 = vmatprep.subr.mxu0 0.0
        %301 = vmatpush1.msra.mxu0 0.0
        %302 = vmatprep.subr.mxu0 0.0
        %303 = vmatpush1.msra.mxu0 0.0
        %304 = vmatprep.subr.mxu0 0.0
        %305 = vmatpush1.msra.mxu0 0.0
        %306 = vmatprep.subr.mxu0 0.0
        %307 = vmatpush1.msra.mxu0 0.0
        %308 = vmatprep.subr.mxu0 0.0
        %309 = vmatpush1.msra.mxu0 0.0
        %310 = vmatprep.subr.mxu0 0.0
        %311 = vmatpush1.msra.mxu0 0.0
        %312 = vmatprep.subr.mxu0 0.0
        %313 = vmatpush1.msra.mxu0 0.0
        %314 = vmatprep.subr.mxu0 0.0
        %315 = vmatpush1.msra.mxu0 0.0
        %316 = vmatprep.subr.mxu0 0.0
        %317 = vmatpush1.msra.mxu0 0.0
        %318 = vmatprep.subr.mxu0 0.0
        %319 = vmatpush1.msra.mxu0 0.0
        %320 = vmatprep.subr.mxu0 0.0
        %321 = vmatpush1.msra.mxu0 0.0
        %322 = vmatprep.subr.mxu0 0.0
        %323 = vmatpush1.msra.mxu0 0.0
        %324 = vmatprep.subr.mxu0 0.0
        %325 = vmatpush1.msra.mxu0 0.0
        %326 = vmatprep.subr.mxu0 0.0
        %327 = vmatpush1.msra.mxu0 0.0
        %328 = vmatprep.subr.mxu0 0.0
        %329 = vmatpush1.msra.mxu0 0.0
        %330 = vmatprep.subr.mxu0 0.0
        %331 = vmatpush1.msra.mxu0 0.0
        %332 = vmatprep.subr.mxu0 0.0
        %333 = vmatpush1.msra.mxu0 0.0
        %334 = vmatprep.subr.mxu0 0.0
        %335 = vmatpush1.msra.mxu0 0.0
        %336 = vmatprep.subr.mxu0 0.0
        %337 = vmatpush1.msra.mxu0 0.0
        %338 = vmatprep.subr.mxu0 0.0
        %339 = vmatpush1.msra.mxu0 0.0
        %340 = vmatprep.subr.mxu0 0.0
        %341 = vmatpush1.msra.mxu0 0.0
        %342 = vmatprep.subr.mxu0 0.0
        %343 = vmatpush1.msra.mxu0 0.0
        %344 = vmatprep.subr.mxu0 0.0
        %345 = vmatpush1.msra.mxu0 0.0
        %346 = vmatprep.mubr.f32.mxu0 0.0
        %347 = vmatmul.mubr.f32.gmra.mrb[0].mxu0 %v259
        %v348 = vpop.f32.mrb[0].mxu0
        %v349 = vadd.f32 0.0, %v348
        %v350 = vpop.f32.mrb[0].mxu0
        %351 = vmatprep.mubr.f32.mxu0 0.0
        %352 = vmatmul.mubr.f32.gmra.mrb[0].mxu0 %v262
        %v353 = vpop.f32.mrb[0].mxu0
        %v354 = vadd.f32 0.0, %v353
        %v355 = vpop.f32.mrb[0].mxu0
        %356 = vmatprep.mubr.f32.mxu0 0.0
        %357 = vmatmul.mubr.f32.gmra.mrb[0].mxu0 %v265
        %v358 = vpop.f32.mrb[0].mxu0
        %v359 = vadd.f32 0.0, %v358
        %v360 = vpop.f32.mrb[0].mxu0
        %361 = vmatprep.mubr.f32.mxu0 0.0
        %362 = vmatmul.mubr.f32.gmra.mrb[0].mxu0 %v268
        %v363 = vpop.f32.mrb[0].mxu0
        %v364 = vadd.f32 0.0, %v363
        %v365 = vpop.f32.mrb[0].mxu0
        %366 = vmatprep.mubr.f32.mxu0 0.0
        %367 = vmatmul.mubr.f32.gmra.mrb[0].mxu0 %v271
        %v368 = vpop.f32.mrb[0].mxu0
        %v369 = vadd.f32 0.0, %v368
        %v370 = vpop.f32.mrb[0].mxu0
        %371 = vmatprep.mubr.f32.mxu0 0.0
        %372 = vmatmul.mubr.f32.gmra.mrb[0].mxu0 %v274
        %v373 = vpop.f32.mrb[0].mxu0
        %v374 = vadd.f32 0.0, %v373
        %v375 = vpop.f32.mrb[0].mxu0
        %376 = vmatprep.mubr.f32.mxu0 0.0
        %377 = vmatmul.mubr.f32.gmra.mrb[0].mxu0 %v277
        %v378 = vpop.f32.mrb[0].mxu0
        %v379 = vadd.f32 0.0, %v378
        %v380 = vpop.f32.mrb[0].mxu0
        %381 = vmatprep.mubr.f32.mxu0 0.0
        %382 = vmatmul.mubr.f32.gmra.mrb[0].mxu0 %v280
        %v383 = vpop.f32.mrb[0].mxu0
        %v384 = vadd.f32 0.0, %v383
        %v385 = vpop.f32.mrb[0].mxu0
        %386 = vdwg.mxu0
        %v387 = vld [vmem:[%s212] sm:$0x1]
        %v388 = vld [vmem:[%s212 + $0x1] sm:$0x1]
        %v389 = vld [vmem:[%s212 + $0x2] sm:$0x1]
        %v390 = vld [vmem:[%s212 + $0x3] sm:$0x1]
        %v395 = vlaneseq
        %v396 = vshrl.u32 %v395, 7
        %v397 = vsub.s32 0, %v396
        %v398 = vrot.slane %v387, %v397
        %v399 = vlaneseq
        %v400 = vshrl.u32 %v399, 7
        %v401 = vsub.s32 0, %v400
        %v402 = vrot.slane %v388, %v401
        %v403 = vlaneseq
        %v404 = vshrl.u32 %v403, 7
        %v405 = vsub.s32 0, %v404
        %v406 = vrot.slane %v389, %v405
        %v407 = vlaneseq
        %v408 = vshrl.u32 %v407, 7
        %v409 = vsub.s32 0, %v408
        %v410 = vrot.slane %v390, %v409
        %v415 = vmul.f32 %v349, %v398
        %v416 = vmul.f32 %v354, %v398
        %v417 = vmul.f32 %v359, %v402
        %v418 = vmul.f32 %v364, %v402
        %v419 = vmul.f32 %v369, %v406
        %v420 = vmul.f32 %v374, %v406
        %v421 = vmul.f32 %v379, %v410
        %v422 = vmul.f32 %v384, %v410
        %vm423 = vcmask 523264
        %424 = vst.msk [vmem:[%s243] sm:$0xff] %vm423, %v415
        %425 = vst.msk [vmem:[%s243 + $0x8] sm:$0xff] %vm423, %v416
        %426 = vst.msk [vmem:[%s243 + $0x10] sm:$0xff] %vm423, %v417
        %427 = vst.msk [vmem:[%s243 + $0x18] sm:$0xff] %vm423, %v418
        %428 = vst.msk [vmem:[%s243 + $0x20] sm:$0xff] %vm423, %v419
        %429 = vst.msk [vmem:[%s243 + $0x28] sm:$0xff] %vm423, %v420
        %430 = vst.msk [vmem:[%s243 + $0x30] sm:$0xff] %vm423, %v421
        %431 = vst.msk [vmem:[%s243 + $0x38] sm:$0xff] %vm423, %v422
        %s432 = sand.u32 %s104, 1
        %s433 = scalar_lea.sflag [#allocation4], %s432
        %s434 = sand.u32 %s104, 1
        %s435 = smul.addr %s434, 64
        %s436 = scalar_lea.vmem [#allocation8], %s435
        // Predicated region
        $region45: #{tpu_custom_call.1} parent=31 // pred_check
          %p437 = pneg %p114
        $region46: #{tpu_custom_call.1} parent=31 // pred_check_branch
          %439 = sbr.rel (%p437) target = $region48
        $region47: #{tpu_custom_call.1} parent=31 // pred_region
          %s440 = smul.u32 4, %s23
          %s442 = ssub.s32 1024, 1024
          %443 = vsyncadd %s433, %s442
          %s444 = smul.addr %s440, 2
          %s445 = smul.addr %s444, 128
          %s446 = scalar_lea.hbm %s3, %s445
          %s447 = sshll.u32 %s436, 4
          %s448 = int_to_ptr.vmem [resolvable:$true] %s447
          %453 = dma.vmem_to_hbm [thread:$0]  %s448, 1024, %s446, %s433, 128, 128, 8
        $region48: #{tpu_custom_call.1} parent=31 // pred_fallthru
          _
      $region32: #{tpu_custom_call.1} parent=5 // pred_fallthru
        _
      %p454 = scmp.le.s32.totalorder 2, %s18
      // Predicated region
      $region49: #{tpu_custom_call.1} parent=5 // pred_check
        %p455 = pneg %p454
      $region50: #{tpu_custom_call.1} parent=5 // pred_check_branch
        %457 = sbr.rel (%p455) target = $region52
      $region51: #{tpu_custom_call.1} parent=5 // pred_region
        %s458 = ssub.s32 %s18, 2
        // Predicated region
        $region53: #{tpu_custom_call.1} parent=51 // pred_check
          %p459 = pneg %p120
        $region54: #{tpu_custom_call.1} parent=51 // pred_check_branch
          %461 = sbr.rel (%p459) target = $region56
        $region55: #{tpu_custom_call.1} parent=51 // pred_region
          %s462 = sand.u32 %s105, 1
          %s463 = scalar_lea.sflag [#allocation4], %s462
          %s464 = sand.u32 %s105, 1
          %s465 = smul.addr %s464, 64
          %s466 = scalar_lea.vmem [#allocation8], %s465
          %467 = dma.done %s463, 1024
        $region56: #{tpu_custom_call.1} parent=51 // pred_fallthru
          _
      $region52: #{tpu_custom_call.1} parent=5 // pred_fallthru
        _
    $region6: #{tpu_custom_call.1} parent=1 // loop_footer
      %s22 = sadd.s32 1, %s18
    $region7: #{tpu_custom_call.1} parent=1 // loop_footer_branch
      %17 = sbr.rel target = $region3
    $region8: #{tpu_custom_call.1} parent=1 // loop_exit
      _
    %468 = vsyncpa [#allocation3], 1
    %s469 = scalar_lea.sflag [#allocation3], 1
    %470 = vsyncpa %s469, 1
    %471 = vsyncpa [#allocation6], 1
    %s472 = scalar_lea.sflag [#allocation6], 1
    %473 = vsyncpa %s472, 1
    %474 = vsyncpa [#allocation4], 1
    %s475 = scalar_lea.sflag [#allocation4], 1
    %476 = vsyncpa %s475, 1

</llo_original>
